<compile_context>
chip_gen: v6e
topology: v6e:2x2x1
jax: 0.10.0
libtpu: 0.0.40
codegen_flags: <defaults>
</compile_context>

<pallas_src>
import jax
import jax.numpy as jnp
from jax.experimental import pallas as pl
from jax.experimental.pallas import tpu as pltpu

MAX_LENGTH = 7
EMBED_DIM = 32
HIDDEN_DIM = 32

# ---- packed weight-slab layout (rows x 128 lanes, f32) ----------------------
ROW_WG = 0      # rows [0, 128)  : stacked LSTM weights  [wih ; whh ; zeros]
ROW_WC = 128    # rows [128, 256): stacked combine weights [wc_x ; wc_a ; zeros]
ROW_WO = 256    # rows [256, 288): output projection wo (cols 0-1 valid)
ROW_B = 288     # rows [288, 296): biases: row0=bih+bhh, row1=bc, row2=bo
W_ROWS = 296


def _decoder_kernel(state_ref, w_ref, out_ref):
    """state_ref: (8,128)  row0 = [x | h | c | 0], rows 1..7 = enc rows @ lanes 32:64
       w_ref:     (296,128) packed weight slab (layout above)
       out_ref:   (1,128)   [logp(2)+pad | h_new(32) | c_new(32) | attw(7)+pad]"""
    S = state_ref[...]                                        # (8, 128) single load
    lane = jax.lax.broadcasted_iota(jnp.int32, (1, 128), 1)
    row0 = S[0:1, :]                                          # [x | h | c | 0]

    # Attention weights are identically 1.0 (softmax over the singleton dim-0),
    # so attention_applied = column-sum of encoder rows (sits at lanes 32:64).
    applied = jnp.sum(S[1:8, :], axis=0, keepdims=True)       # [0 | sum(enc) | 0 | 0]

    bias_blk = w_ref[ROW_B:ROW_B + 8, :]                      # (8,128) aligned tile
    b_gates = bias_blk[0:1, :]
    b_comb = bias_blk[1:2, :]
    b_out = bias_blk[2:3, :]

    # attention_combine(cat([embedded, applied])) + ReLU  -- one fused K=128 GEMV
    x_app = jnp.where(lane < EMBED_DIM, row0, applied)        # [x | applied | 0 | 0]
    comb = jnp.dot(x_app, w_ref[ROW_WC:ROW_WC + 128, :],
                   preferred_element_type=jnp.float32) + b_comb
    lstm_in = jnp.maximum(comb, 0.0)                          # lanes 0-31 valid, rest 0

    # single-step LSTM: gates = [lstm_in | h] @ [wih ; whh] + (bih + bhh)
    # (weight rows 64-127 are zero, so the c / padding lanes contribute nothing)
    lh = jnp.where(lane < HIDDEN_DIM, lstm_in, row0)          # [lstm_in | h | c | 0]
    gates = jnp.dot(lh, w_ref[ROW_WG:ROW_WG + 128, :],
                    preferred_element_type=jnp.float32) + b_gates   # [i | f | g | o]

    sig = jax.nn.sigmoid(gates)                               # one full-width EUP pass
    tnh = jnp.tanh(gates)                                     # one full-width EUP pass
    i_g = sig[:, 0:32]
    f_g = sig[:, 32:64]
    g_g = tnh[:, 64:96]
    o_g = sig[:, 96:128]
    c_prev = row0[:, 64:96]
    c_new = f_g * c_prev + i_g * g_g                          # (1, 32)
    h_new = o_g * jnp.tanh(c_new)                             # (1, 32)

    # linearOut(output[-1]) followed by log_softmax over the 2 valid columns
    logits = jnp.dot(h_new, w_ref[ROW_WO:ROW_WO + 32, :],
                     preferred_element_type=jnp.float32) + b_out    # lanes 0-1 valid
    masked = jnp.where(lane < 2, logits, -jnp.inf)
    m = jnp.max(masked, axis=1, keepdims=True)
    lse = jnp.log(jnp.sum(jnp.exp(masked - m), axis=1, keepdims=True)) + m
    logp = jnp.where(lane < 2, logits - lse, jnp.float32(0.0))      # (1,128)

    # pack all outputs into one lane-dense (1,128) row (single unmasked store)
    lane32 = jax.lax.broadcasted_iota(jnp.int32, (1, 32), 1)
    attw32 = jnp.where(lane32 < MAX_LENGTH, jnp.float32(1.0), jnp.float32(0.0))
    out_ref[...] = jnp.concatenate([logp[:, 0:32], h_new, c_new, attw32], axis=1)


def init_params(key, embedding_dim=EMBED_DIM, hidden_dim=HIDDEN_DIM,
                max_length=MAX_LENGTH):
    """Deterministic init mimicking PyTorch defaults (U(-1/sqrt(fan_in), ..))."""
    ks = jax.random.split(key, 10)

    def unif(k, shape, fan_in):
        bound = 1.0 / jnp.sqrt(jnp.float32(fan_in))
        return jax.random.uniform(k, shape, jnp.float32, -bound, bound)

    cat_dim = hidden_dim + embedding_dim
    # Linear weights generated in PyTorch (out, in) layout, then transposed.
    w_attn = unif(ks[0], (max_length, cat_dim), cat_dim).T        # dead (see header)
    b_attn = unif(ks[1], (1, max_length), cat_dim)                # dead
    w_comb = unif(ks[2], (hidden_dim, cat_dim), cat_dim).T        # (E+H, H)
    b_comb = unif(ks[3], (1, hidden_dim), cat_dim)
    w_ih = unif(ks[4], (4 * hidden_dim, hidden_dim), hidden_dim).T   # (H, 4H)
    b_ih = unif(ks[5], (1, 4 * hidden_dim), hidden_dim)
    w_hh = unif(ks[6], (4 * hidden_dim, hidden_dim), hidden_dim).T   # (H, 4H)
    b_hh = unif(ks[7], (1, 4 * hidden_dim), hidden_dim)
    w_out = unif(ks[8], (2, hidden_dim), hidden_dim).T               # (H, 2)
    b_out = unif(ks[9], (1, 2), hidden_dim)

    return {
        "wa_x": w_attn[:embedding_dim], "wa_h": w_attn[embedding_dim:], "ba": b_attn,
        "wc_x": w_comb[:embedding_dim], "wc_a": w_comb[embedding_dim:], "bc": b_comb,
        "wih": w_ih, "bih": b_ih, "whh": w_hh, "bhh": b_hh,
        "wo": w_out, "bo": b_out,
    }


def pack_params(params):
    """Pack all live weights/biases into one lane-dense (296,128) f32 slab."""
    assert EMBED_DIM == 32 and HIDDEN_DIM == 32, "lane layout assumes E=H=32"
    H = HIDDEN_DIM
    slab = jnp.zeros((W_ROWS, 128), jnp.float32)
    # stacked LSTM weights: rows act on [lstm_in | h | 0 | 0]
    slab = slab.at[ROW_WG:ROW_WG + H, 0:4 * H].set(params["wih"])
    slab = slab.at[ROW_WG + H:ROW_WG + 2 * H, 0:4 * H].set(params["whh"])
    # stacked combine weights: rows act on [x | applied | 0 | 0]
    slab = slab.at[ROW_WC:ROW_WC + EMBED_DIM, 0:H].set(params["wc_x"])
    slab = slab.at[ROW_WC + EMBED_DIM:ROW_WC + EMBED_DIM + H, 0:H].set(params["wc_a"])
    # output projection
    slab = slab.at[ROW_WO:ROW_WO + H, 0:2].set(params["wo"])
    # biases
    slab = slab.at[ROW_B + 0, :].set((params["bih"] + params["bhh"])[0])
    slab = slab.at[ROW_B + 1, 0:H].set(params["bc"][0])
    slab = slab.at[ROW_B + 2, 0:2].set(params["bo"][0])
    return slab


def _pack_state(inputs, hidden, encoder_outputs):
    x = inputs.reshape(1, -1).astype(jnp.float32)                   # (1, E)
    h0 = hidden[0].reshape(1, -1).astype(jnp.float32)               # (1, H)
    c0 = hidden[1].reshape(1, -1).astype(jnp.float32)               # (1, H)
    enc = encoder_outputs.reshape(MAX_LENGTH, -1).astype(jnp.float32)  # (L, H)
    state = jnp.zeros((8, 128), jnp.float32)
    state = state.at[0, 0:EMBED_DIM].set(x[0])
    state = state.at[0, 32:32 + HIDDEN_DIM].set(h0[0])
    state = state.at[0, 64:64 + HIDDEN_DIM].set(c0[0])
    state = state.at[1:1 + MAX_LENGTH, 32:32 + HIDDEN_DIM].set(enc)
    return state


@jax.jit
def attention_decoder_lstm(inputs, hidden, encoder_outputs, w_slab):
    """JAX/Pallas equivalent of AttentionDecoderLSTM.forward (one decode step)."""
    state = _pack_state(inputs, hidden, encoder_outputs)
    vmem = pl.BlockSpec(memory_space=pltpu.MemorySpace.VMEM)
    packed = pl.pallas_call(
        _decoder_kernel,
        out_shape=jax.ShapeDtypeStruct((1, 128), jnp.float32),
        in_specs=[vmem, vmem],
        out_specs=vmem,
    )(state, w_slab)

    out = packed[:, 0:2]                                           # log-probs (1,2)
    h_new = packed[:, 32:64].reshape(1, 1, HIDDEN_DIM)
    c_new = packed[:, 64:96].reshape(1, 1, HIDDEN_DIM)
    attw = packed[:, 96:96 + MAX_LENGTH].reshape(1, 1, MAX_LENGTH)
    return out, (h_new, c_new), attw


def _reference(inputs, hidden, encoder_outputs, params):
    """Pure-JAX reference of the PyTorch forward (for a sanity check only)."""
    x = inputs.reshape(1, -1)
    h0 = hidden[0].reshape(1, -1)
    c0 = hidden[1].reshape(1, -1)
    enc = encoder_outputs.reshape(MAX_LENGTH, -1)
    attw = jnp.ones((1, MAX_LENGTH), jnp.float32)          # softmax over singleton dim
    applied = attw @ enc
    comb = x @ params["wc_x"] + applied @ params["wc_a"] + params["bc"]
    lstm_in = jnp.maximum(comb, 0.0)
    gates = lstm_in @ params["wih"] + params["bih"] + h0 @ params["whh"] + params["bhh"]
    H = HIDDEN_DIM
    i_g = jax.nn.sigmoid(gates[:, 0:H])
    f_g = jax.nn.sigmoid(gates[:, H:2 * H])
    g_g = jnp.tanh(gates[:, 2 * H:3 * H])
    o_g = jax.nn.sigmoid(gates[:, 3 * H:4 * H])
    c_new = f_g * c0 + i_g * g_g
    h_new = o_g * jnp.tanh(c_new)
    logits = h_new @ params["wo"] + params["bo"]
    logp = jax.nn.log_softmax(logits, axis=1)
    return logp, (h_new, c_new), attw


if __name__ == "__main__":
    key = jax.random.PRNGKey(0)
    k_in, k_h, k_c, k_enc, k_p = jax.random.split(key, 5)

    inputs = jax.random.normal(k_in, (1, 1, EMBED_DIM), jnp.float32)
    hidden = (
        jax.random.normal(k_h, (1, 1, HIDDEN_DIM), jnp.float32),
        jax.random.normal(k_c, (1, 1, HIDDEN_DIM), jnp.float32),
    )
    encoder_outputs = jax.random.normal(k_enc, (MAX_LENGTH, HIDDEN_DIM), jnp.float32)
    params = init_params(k_p)
    w_slab = pack_params(params)

    out, hidden_out, attention_weights = attention_decoder_lstm(
        inputs, hidden, encoder_outputs, w_slab
    )
    jax.block_until_ready((out, hidden_out, attention_weights))

    assert out.shape == (1, 2)
    assert hidden_out[0].shape == (1, 1, HIDDEN_DIM)
    assert hidden_out[1].shape == (1, 1, HIDDEN_DIM)
    assert attention_weights.shape == (1, 1, MAX_LENGTH)

    # loose sanity check against a pure-JAX reference (tolerant of MXU bf16 passes)
    ref_out, (ref_h, ref_c), ref_attw = _reference(inputs, hidden, encoder_outputs, params)
    assert jnp.allclose(out, ref_out, atol=5e-2, rtol=5e-2)
    assert jnp.allclose(hidden_out[0].reshape(1, -1), ref_h, atol=5e-2, rtol=5e-2)
    assert jnp.allclose(hidden_out[1].reshape(1, -1), ref_c, atol=5e-2, rtol=5e-2)
    assert jnp.allclose(attention_weights.reshape(1, -1), ref_attw)

    print("KERNEL_OK")
</pallas_src>

<mosaic_0001>
module attributes {stable_mosaic.version = 11 : i64} {
  func.func @_decoder_kernel(%arg0: memref<8x128xf32, #tpu.memory_space<vmem>>, %arg1: memref<296x128xf32, #tpu.memory_space<vmem>>, %arg2: memref<1x128xf32, #tpu.memory_space<vmem>>) attributes {dimension_semantics = [], scalar_prefetch = 0 : i64, scratch_operands = 0 : i64, tpu.core_type = #tpu.core_type<tc>} {
    %c0 = arith.constant 0 : index
    %c0_0 = arith.constant 0 : index
    %0 = vector.load %arg0[%c0, %c0_0] : memref<8x128xf32, #tpu.memory_space<vmem>>, vector<8x128xf32>
    %1 = tpu.iota {dimensions = array<i32: 1>} : vector<1x128xi32>
    %2 = vector.extract_strided_slice %0 {offsets = [0, 0], sizes = [1, 128], strides = [1, 1]} : vector<8x128xf32> to vector<1x128xf32>
    %3 = vector.extract_strided_slice %0 {offsets = [1, 0], sizes = [7, 128], strides = [1, 1]} : vector<8x128xf32> to vector<7x128xf32>
    %cst = arith.constant dense<0.000000e+00> : vector<128xf32>
    %4 = vector.multi_reduction <add>, %3, %cst [0] : vector<7x128xf32> to vector<128xf32>
    %5 = vector.shape_cast %4 : vector<128xf32> to vector<1x128xf32>
    %c288 = arith.constant 288 : index
    %c0_1 = arith.constant 0 : index
    %6 = vector.load %arg1[%c288, %c0_1] : memref<296x128xf32, #tpu.memory_space<vmem>>, vector<8x128xf32>
    %7 = vector.extract_strided_slice %6 {offsets = [0, 0], sizes = [1, 128], strides = [1, 1]} : vector<8x128xf32> to vector<1x128xf32>
    %8 = vector.extract_strided_slice %6 {offsets = [1, 0], sizes = [1, 128], strides = [1, 1]} : vector<8x128xf32> to vector<1x128xf32>
    %9 = vector.extract_strided_slice %6 {offsets = [2, 0], sizes = [1, 128], strides = [1, 1]} : vector<8x128xf32> to vector<1x128xf32>
    %c32_i32 = arith.constant 32 : i32
    %10 = vector.broadcast %c32_i32 : i32 to vector<1x128xi32>
    %11 = arith.cmpi slt, %1, %10 : vector<1x128xi32>
    %12 = arith.select %11, %2, %5 : vector<1x128xi1>, vector<1x128xf32>
    %c128 = arith.constant 128 : index
    %c0_2 = arith.constant 0 : index
    %13 = vector.load %arg1[%c128, %c0_2] : memref<296x128xf32, #tpu.memory_space<vmem>>, vector<128x128xf32>
    %cst_3 = arith.constant dense<0.000000e+00> : vector<1x128xf32>
    %14 = tpu.matmul %12, %13, %cst_3 {dimension_numbers = #tpu.dot_dimension_numbers<[1], [0], [0], [1], [0, 0, 1, 1], [], []>} : vector<1x128xf32>, vector<128x128xf32>, vector<1x128xf32> -> vector<1x128xf32>
    %15 = arith.addf %14, %8 : vector<1x128xf32>
    %cst_4 = arith.constant 0.000000e+00 : f32
    %16 = vector.broadcast %cst_4 : f32 to vector<1x128xf32>
    %17 = arith.maximumf %15, %16 : vector<1x128xf32>
    %c32_i32_5 = arith.constant 32 : i32
    %18 = vector.broadcast %c32_i32_5 : i32 to vector<1x128xi32>
    %19 = arith.cmpi slt, %1, %18 : vector<1x128xi32>
    %20 = arith.select %19, %17, %2 : vector<1x128xi1>, vector<1x128xf32>
    %c0_6 = arith.constant 0 : index
    %c0_7 = arith.constant 0 : index
    %21 = vector.load %arg1[%c0_6, %c0_7] : memref<296x128xf32, #tpu.memory_space<vmem>>, vector<128x128xf32>
    %cst_8 = arith.constant dense<0.000000e+00> : vector<1x128xf32>
    %22 = tpu.matmul %20, %21, %cst_8 {dimension_numbers = #tpu.dot_dimension_numbers<[1], [0], [0], [1], [0, 0, 1, 1], [], []>} : vector<1x128xf32>, vector<128x128xf32>, vector<1x128xf32> -> vector<1x128xf32>
    %23 = arith.addf %22, %7 : vector<1x128xf32>
    %24 = arith.negf %23 : vector<1x128xf32>
    %25 = math.exp %24 : vector<1x128xf32>
    %cst_9 = arith.constant 1.000000e+00 : f32
    %26 = vector.broadcast %cst_9 : f32 to vector<1x128xf32>
    %27 = arith.addf %26, %25 : vector<1x128xf32>
    %28 = arith.divf %26, %27 : vector<1x128xf32>
    %29 = math.tanh %23 : vector<1x128xf32>
    %30 = vector.extract_strided_slice %28 {offsets = [0, 0], sizes = [1, 32], strides = [1, 1]} : vector<1x128xf32> to vector<1x32xf32>
    %31 = vector.extract_strided_slice %28 {offsets = [0, 32], sizes = [1, 32], strides = [1, 1]} : vector<1x128xf32> to vector<1x32xf32>
    %32 = vector.extract_strided_slice %29 {offsets = [0, 64], sizes = [1, 32], strides = [1, 1]} : vector<1x128xf32> to vector<1x32xf32>
    %33 = vector.extract_strided_slice %28 {offsets = [0, 96], sizes = [1, 32], strides = [1, 1]} : vector<1x128xf32> to vector<1x32xf32>
    %34 = vector.extract_strided_slice %2 {offsets = [0, 64], sizes = [1, 32], strides = [1, 1]} : vector<1x128xf32> to vector<1x32xf32>
    %35 = arith.mulf %31, %34 : vector<1x32xf32>
    %36 = arith.mulf %30, %32 : vector<1x32xf32>
    %37 = arith.addf %35, %36 : vector<1x32xf32>
    %38 = math.tanh %37 : vector<1x32xf32>
    %39 = arith.mulf %33, %38 : vector<1x32xf32>
    %c256 = arith.constant 256 : index
    %c0_10 = arith.constant 0 : index
    %40 = vector.load %arg1[%c256, %c0_10] : memref<296x128xf32, #tpu.memory_space<vmem>>, vector<32x128xf32>
    %cst_11 = arith.constant dense<0.000000e+00> : vector<1x128xf32>
    %41 = tpu.matmul %39, %40, %cst_11 {dimension_numbers = #tpu.dot_dimension_numbers<[1], [0], [0], [1], [0, 0, 1, 1], [], []>} : vector<1x32xf32>, vector<32x128xf32>, vector<1x128xf32> -> vector<1x128xf32>
    %42 = arith.addf %41, %9 : vector<1x128xf32>
    %c2_i32 = arith.constant 2 : i32
    %43 = vector.broadcast %c2_i32 : i32 to vector<1x128xi32>
    %44 = arith.cmpi slt, %1, %43 : vector<1x128xi32>
    %cst_12 = arith.constant 0xFF800000 : f32
    %45 = vector.broadcast %cst_12 : f32 to vector<1x128xf32>
    %46 = arith.select %44, %42, %45 : vector<1x128xi1>, vector<1x128xf32>
    %cst_13 = arith.constant dense<0xFF800000> : vector<1xf32>
    %47 = vector.multi_reduction <maximumf>, %46, %cst_13 [1] : vector<1x128xf32> to vector<1xf32>
    %48 = vector.shape_cast %47 : vector<1xf32> to vector<1x1xf32>
    %49 = vector.broadcast %48 : vector<1x1xf32> to vector<1x128xf32>
    %50 = arith.subf %46, %49 : vector<1x128xf32>
    %51 = math.exp %50 : vector<1x128xf32>
    %cst_14 = arith.constant dense<0.000000e+00> : vector<1xf32>
    %52 = vector.multi_reduction <add>, %51, %cst_14 [1] : vector<1x128xf32> to vector<1xf32>
    %53 = vector.shape_cast %52 : vector<1xf32> to vector<1x1xf32>
    %54 = math.log %53 : vector<1x1xf32>
    %55 = arith.addf %54, %48 : vector<1x1xf32>
    %c2_i32_15 = arith.constant 2 : i32
    %56 = vector.broadcast %c2_i32_15 : i32 to vector<1x128xi32>
    %57 = arith.cmpi slt, %1, %56 : vector<1x128xi32>
    %58 = vector.broadcast %55 : vector<1x1xf32> to vector<1x128xf32>
    %59 = arith.subf %42, %58 : vector<1x128xf32>
    %cst_16 = arith.constant 0.000000e+00 : f32
    %60 = vector.broadcast %cst_16 : f32 to vector<1x128xf32>
    %61 = arith.select %57, %59, %60 : vector<1x128xi1>, vector<1x128xf32>
    %62 = tpu.iota {dimensions = array<i32: 1>} : vector<1x32xi32>
    %c7_i32 = arith.constant 7 : i32
    %63 = vector.broadcast %c7_i32 : i32 to vector<1x32xi32>
    %64 = arith.cmpi slt, %62, %63 : vector<1x32xi32>
    %cst_17 = arith.constant 1.000000e+00 : f32
    %cst_18 = arith.constant 0.000000e+00 : f32
    %65 = vector.broadcast %cst_17 : f32 to vector<1x32xf32>
    %66 = vector.broadcast %cst_18 : f32 to vector<1x32xf32>
    %67 = arith.select %64, %65, %66 : vector<1x32xi1>, vector<1x32xf32>
    %68 = vector.extract_strided_slice %61 {offsets = [0, 0], sizes = [1, 32], strides = [1, 1]} : vector<1x128xf32> to vector<1x32xf32>
    %69 = tpu.concatenate %68, %39, %37, %67 in 1 : vector<1x32xf32>, vector<1x32xf32>, vector<1x32xf32>, vector<1x32xf32> -> vector<1x128xf32>
    %c0_19 = arith.constant 0 : index
    %c0_20 = arith.constant 0 : index
    %70 = vector.load %arg2[%c0_19, %c0_20] : memref<1x128xf32, #tpu.memory_space<vmem>>, vector<1x128xf32>
    tpu.vector_store %arg2[%c0_19, %c0_20], %69 {strides = array<i32>} : memref<1x128xf32, #tpu.memory_space<vmem>>, vector<1x128xf32>,
    return
  }
}

</mosaic_0001>

<llo_original>
// kernel: attention_decoder_lstm.1
$region0: #{attention_decoder_lstm.1}
  #allocation0 [shape = 'u32[]', space=smem, size = 0x4, offset = 0x4, fixed_abs, tag = 'smem constant byte address 0x4 - core index']
  #allocation1 [shape = 'u32[144,128]{1,0:T(1,128)}', space=vmem, size = 0x12000, scoped, tag = 'internal scratch']
  %s0 = inlined_call_operand.vmem [shape: f32[8,128], index: 0, kind: input, shape index: {}]
  %s1 = inlined_call_operand.hbm [shape: f32[296,128], index: 1, kind: input, shape index: {}]
  %s2 = inlined_call_operand.vmem [shape: f32[1,128], index: 2, kind: output, shape index: {}]
  %s3 = sld [smem:[#allocation0]]
  $region22: #{attention_decoder_lstm.1} parent=0
    _
  %s5 = ssub.s32 1, %s3
  %s6 = scalar_select 0, %s5, %s3
  $region1: #{attention_decoder_lstm.1} parent=0
    #allocation2 [shape = 'u8[151552]{0}', space=vmem, size = 0x25000, scoped, tag = 'input window, operand 1, single buffered']
    #allocation3 [shape = 's32[1]{0}', space=sflag, size = 0x4, scoped, tag = 'scoped memory for attention_decoder_lstm.1']
    %7 = vsyncpa [#allocation3], 0
    // Predicated region
    $region2: #{attention_decoder_lstm.1} parent=1 // pred_check
      _
    $region3: #{attention_decoder_lstm.1} parent=1 // pred_check_branch
      %9 = sbr.rel (0) target = $region5
    $region4: #{attention_decoder_lstm.1} parent=1 // pred_region
      _
    $region5: #{attention_decoder_lstm.1} parent=1 // pred_fallthru
      _
    // Predicated region
    $region6: #{attention_decoder_lstm.1} parent=1 // pred_check
      _
    $region7: #{attention_decoder_lstm.1} parent=1 // pred_check_branch
      %11 = sbr.rel (0) target = $region9
    $region8: #{attention_decoder_lstm.1} parent=1 // pred_region
      %s13 = ssub.s32 4736, 4736
      %14 = vsyncadd [#allocation3], %s13
      %s15 = sshll.u32 [#allocation2], 4
      %s16 = int_to_ptr.vmem [resolvable:$true] %s15
      %21 = dma.hbm_to_vmem [thread:$0]  %s1, 4736, %s16, [#allocation3], 128, 128, 8
    $region9: #{attention_decoder_lstm.1} parent=1 // pred_fallthru
      _
    // Predicated region
    $region10: #{attention_decoder_lstm.1} parent=1 // pred_check
      _
    $region11: #{attention_decoder_lstm.1} parent=1 // pred_check_branch
      %23 = sbr.rel (0) target = $region13
    $region12: #{attention_decoder_lstm.1} parent=1 // pred_region
      %24 = dma.done [#allocation3], 4736
    $region13: #{attention_decoder_lstm.1} parent=1 // pred_fallthru
      _
    %v25 = vld [vmem:[%s0] sm:$0xff]
    %v26 = vlaneseq
    %v27 = vand.u32 %v26, 127
    %v29 = vrot.slane %v25, 1
    %vm31 = vcmask 1046528
    %v32 = vsel %vm31, %v29, 0.0
    %v33 = vrot.slane %v32, 4
    %v34 = vadd.f32 %v32, %v33
    %v35 = vrot.slane %v34, 2
    %v36 = vadd.f32 %v34, %v35
    %v37 = vrot.slane %v36, 1
    %v38 = vadd.f32 %v36, %v37
    %v39 = vld [vmem:[#allocation2 + $0x120] sm:$0xff]
    %vm40 = vcmp.lt.s32.totalorder %v27, 32
    %v41 = vsel %vm40, %v25, %v38
    %v42 = vld [vmem:[#allocation2 + $0x80] sm:$0xff]
    %v43 = vld [vmem:[#allocation2 + $0x88] sm:$0xff]
    %v44 = vld [vmem:[#allocation2 + $0x90] sm:$0xff]
    %v45 = vld [vmem:[#allocation2 + $0x98] sm:$0xff]
    %v46 = vld [vmem:[#allocation2 + $0xa0] sm:$0xff]
    %v47 = vld [vmem:[#allocation2 + $0xa8] sm:$0xff]
    %v48 = vld [vmem:[#allocation2 + $0xb0] sm:$0xff]
    %v49 = vld [vmem:[#allocation2 + $0xb8] sm:$0xff]
    %v50 = vld [vmem:[#allocation2 + $0xc0] sm:$0xff]
    %v51 = vld [vmem:[#allocation2 + $0xc8] sm:$0xff]
    %v52 = vld [vmem:[#allocation2 + $0xd0] sm:$0xff]
    %v53 = vld [vmem:[#allocation2 + $0xd8] sm:$0xff]
    %v54 = vld [vmem:[#allocation2 + $0xe0] sm:$0xff]
    %v55 = vld [vmem:[#allocation2 + $0xe8] sm:$0xff]
    %v56 = vld [vmem:[#allocation2 + $0xf0] sm:$0xff]
    %v57 = vld [vmem:[#allocation2 + $0xf8] sm:$0xff]
    %v59 = vrot.slane %v39, 1
    %61 = vmatprep.subr.mxu0 0.0
    %62 = vmatpush1.msra.mxu0 %v57
    %63 = vmatprep.subr.mxu0 0.0
    %64 = vmatpush1.msra.mxu0 %v56
    %65 = vmatprep.subr.mxu0 0.0
    %66 = vmatpush1.msra.mxu0 %v55
    %67 = vmatprep.subr.mxu0 0.0
    %68 = vmatpush1.msra.mxu0 %v54
    %69 = vmatprep.subr.mxu0 0.0
    %70 = vmatpush1.msra.mxu0 %v53
    %71 = vmatprep.subr.mxu0 0.0
    %72 = vmatpush1.msra.mxu0 %v52
    %73 = vmatprep.subr.mxu0 0.0
    %74 = vmatpush1.msra.mxu0 %v51
    %75 = vmatprep.subr.mxu0 0.0
    %76 = vmatpush1.msra.mxu0 %v50
    %77 = vmatprep.subr.mxu0 0.0
    %78 = vmatpush1.msra.mxu0 %v49
    %79 = vmatprep.subr.mxu0 0.0
    %80 = vmatpush1.msra.mxu0 %v48
    %81 = vmatprep.subr.mxu0 0.0
    %82 = vmatpush1.msra.mxu0 %v47
    %83 = vmatprep.subr.mxu0 0.0
    %84 = vmatpush1.msra.mxu0 %v46
    %85 = vmatprep.subr.mxu0 0.0
    %86 = vmatpush1.msra.mxu0 %v45
    %87 = vmatprep.subr.mxu0 0.0
    %88 = vmatpush1.msra.mxu0 %v44
    %89 = vmatprep.subr.mxu0 0.0
    %90 = vmatpush1.msra.mxu0 %v43
    %91 = vmatprep.subr.mxu0 0.0
    %92 = vmatpush1.msra.mxu0 %v42
    %93 = vmatprep.subr.mxu0 0.0
    %94 = vmatpush2.msra.mxu0 0.0
    %95 = vmatprep.subr.mxu0 0.0
    %96 = vmatpush2.msra.mxu0 0.0
    %97 = vmatprep.subr.mxu0 0.0
    %98 = vmatpush2.msra.mxu0 0.0
    %99 = vmatprep.subr.mxu0 0.0
    %100 = vmatpush2.msra.mxu0 0.0
    %101 = vmatprep.subr.mxu0 0.0
    %102 = vmatpush2.msra.mxu0 0.0
    %103 = vmatprep.subr.mxu0 0.0
    %104 = vmatpush2.msra.mxu0 0.0
    %105 = vmatprep.subr.mxu0 0.0
    %106 = vmatpush2.msra.mxu0 0.0
    %107 = vmatprep.subr.mxu0 0.0
    %108 = vmatpush2.msra.mxu0 0.0
    %109 = vmatprep.subr.mxu0 0.0
    %110 = vmatpush2.msra.mxu0 0.0
    %111 = vmatprep.subr.mxu0 0.0
    %112 = vmatpush2.msra.mxu0 0.0
    %113 = vmatprep.subr.mxu0 0.0
    %114 = vmatpush2.msra.mxu0 0.0
    %115 = vmatprep.subr.mxu0 0.0
    %116 = vmatpush2.msra.mxu0 0.0
    %117 = vmatprep.subr.mxu0 0.0
    %118 = vmatpush2.msra.mxu0 0.0
    %119 = vmatprep.subr.mxu0 0.0
    %120 = vmatpush2.msra.mxu0 0.0
    %121 = vmatprep.subr.mxu0 0.0
    %122 = vmatpush2.msra.mxu0 0.0
    %123 = vmatprep.subr.mxu0 0.0
    %124 = vmatpush2.msra.mxu0 0.0
    %125 = vmatprep.mubr.f32.mxu0 0.0
    %126 = vmatmul.mubr.f32.gmra.mxu0 %v41
    %v127 = vpop.f32.mrf.mxu0
    %v128 = vadd.f32 %v59, %v127
    %v129 = vpop.f32.mrf.mxu0
    %130 = vdwg.mxu0
    %v131 = vmax.f32 %v128, 0.0
    %v132 = vsel %vm40, %v131, %v25
    %v133 = vld [vmem:[#allocation2] sm:$0xff]
    %v134 = vld [vmem:[#allocation2 + $0x8] sm:$0xff]
    %v135 = vld [vmem:[#allocation2 + $0x10] sm:$0xff]
    %v136 = vld [vmem:[#allocation2 + $0x18] sm:$0xff]
    %v137 = vld [vmem:[#allocation2 + $0x20] sm:$0xff]
    %v138 = vld [vmem:[#allocation2 + $0x28] sm:$0xff]
    %v139 = vld [vmem:[#allocation2 + $0x30] sm:$0xff]
    %v140 = vld [vmem:[#allocation2 + $0x38] sm:$0xff]
    %v141 = vld [vmem:[#allocation2 + $0x40] sm:$0xff]
    %v142 = vld [vmem:[#allocation2 + $0x48] sm:$0xff]
    %v143 = vld [vmem:[#allocation2 + $0x50] sm:$0xff]
    %v144 = vld [vmem:[#allocation2 + $0x58] sm:$0xff]
    %v145 = vld [vmem:[#allocation2 + $0x60] sm:$0xff]
    %v146 = vld [vmem:[#allocation2 + $0x68] sm:$0xff]
    %v147 = vld [vmem:[#allocation2 + $0x70] sm:$0xff]
    %v148 = vld [vmem:[#allocation2 + $0x78] sm:$0xff]
    %149 = vmatprep.subr.mxu0 0.0
    %150 = vmatpush1.msra.mxu0 %v148
    %151 = vmatprep.subr.mxu0 0.0
    %152 = vmatpush1.msra.mxu0 %v147
    %153 = vmatprep.subr.mxu0 0.0
    %154 = vmatpush1.msra.mxu0 %v146
    %155 = vmatprep.subr.mxu0 0.0
    %156 = vmatpush1.msra.mxu0 %v145
    %157 = vmatprep.subr.mxu0 0.0
    %158 = vmatpush1.msra.mxu0 %v144
    %159 = vmatprep.subr.mxu0 0.0
    %160 = vmatpush1.msra.mxu0 %v143
    %161 = vmatprep.subr.mxu0 0.0
    %162 = vmatpush1.msra.mxu0 %v142
    %163 = vmatprep.subr.mxu0 0.0
    %164 = vmatpush1.msra.mxu0 %v141
    %165 = vmatprep.subr.mxu0 0.0
    %166 = vmatpush1.msra.mxu0 %v140
    %167 = vmatprep.subr.mxu0 0.0
    %168 = vmatpush1.msra.mxu0 %v139
    %169 = vmatprep.subr.mxu0 0.0
    %170 = vmatpush1.msra.mxu0 %v138
    %171 = vmatprep.subr.mxu0 0.0
    %172 = vmatpush1.msra.mxu0 %v137
    %173 = vmatprep.subr.mxu0 0.0
    %174 = vmatpush1.msra.mxu0 %v136
    %175 = vmatprep.subr.mxu0 0.0
    %176 = vmatpush1.msra.mxu0 %v135
    %177 = vmatprep.subr.mxu0 0.0
    %178 = vmatpush1.msra.mxu0 %v134
    %179 = vmatprep.subr.mxu0 0.0
    %180 = vmatpush1.msra.mxu0 %v133
    %181 = vmatprep.subr.mxu0 0.0
    %182 = vmatpush2.msra.mxu0 0.0
    %183 = vmatprep.subr.mxu0 0.0
    %184 = vmatpush2.msra.mxu0 0.0
    %185 = vmatprep.subr.mxu0 0.0
    %186 = vmatpush2.msra.mxu0 0.0
    %187 = vmatprep.subr.mxu0 0.0
    %188 = vmatpush2.msra.mxu0 0.0
    %189 = vmatprep.subr.mxu0 0.0
    %190 = vmatpush2.msra.mxu0 0.0
    %191 = vmatprep.subr.mxu0 0.0
    %192 = vmatpush2.msra.mxu0 0.0
    %193 = vmatprep.subr.mxu0 0.0
    %194 = vmatpush2.msra.mxu0 0.0
    %195 = vmatprep.subr.mxu0 0.0
    %196 = vmatpush2.msra.mxu0 0.0
    %197 = vmatprep.subr.mxu0 0.0
    %198 = vmatpush2.msra.mxu0 0.0
    %199 = vmatprep.subr.mxu0 0.0
    %200 = vmatpush2.msra.mxu0 0.0
    %201 = vmatprep.subr.mxu0 0.0
    %202 = vmatpush2.msra.mxu0 0.0
    %203 = vmatprep.subr.mxu0 0.0
    %204 = vmatpush2.msra.mxu0 0.0
    %205 = vmatprep.subr.mxu0 0.0
    %206 = vmatpush2.msra.mxu0 0.0
    %207 = vmatprep.subr.mxu0 0.0
    %208 = vmatpush2.msra.mxu0 0.0
    %209 = vmatprep.subr.mxu0 0.0
    %210 = vmatpush2.msra.mxu0 0.0
    %211 = vmatprep.subr.mxu0 0.0
    %212 = vmatpush2.msra.mxu0 0.0
    %213 = vmatprep.mubr.f32.mxu0 0.0
    %214 = vmatmul.mubr.f32.gmra.mxu0 %v132
    %v215 = vpop.f32.mrf.mxu0
    %v216 = vadd.f32 %v39, %v215
    %v217 = vpop.f32.mrf.mxu0
    %218 = vdwg.mxu0
    %v219 = vxor.u32 %v216, 2147483648
    %v220 = vmul.f32 %v219, 1.442695
    %v221 = vpow.pop %v220
    %v222 = vadd.f32 %v221, 1.0
    %v223 = vrcp.pop %v222
    %v224 = vmul.f32 1.0, %v223
    %v225 = vtanh.pop %v216
    %226 = vrot.lane.b32.xlu0 %v25, 96
    %v227 = vpop.permute.xlu0 %226
    %v229 = vmul.f32 %v224, %v227
    %231 = vrot.lane.b32.xlu0 %v225, 64
    %v232 = vpop.permute.xlu0 %231
    %v234 = vmul.f32 %v224, %v232
    %236 = vrot.lane.b32.xlu0 %v234, 32
    %v237 = vpop.permute.xlu0 %236
    %v239 = vadd.f32 %v229, %v237
    %v240 = vtanh.pop %v239
    %242 = vrot.lane.b32.xlu0 %v240, 64
    %v243 = vpop.permute.xlu0 %242
    %v245 = vmul.f32 %v224, %v243
    %v246 = vld [vmem:[#allocation2 + $0x100] sm:$0xff]
    %v247 = vld [vmem:[#allocation2 + $0x108] sm:$0xff]
    %v248 = vld [vmem:[#allocation2 + $0x110] sm:$0xff]
    %v249 = vld [vmem:[#allocation2 + $0x118] sm:$0xff]
    %251 = vrot.lane.b32.xlu0 %v245, 32
    %v252 = vpop.permute.xlu0 %251
    %v253 = vrot.slane %v39, 2
    %vm255 = vcmask 261120
    %v256 = vsel %vm255, %v252, 0
    %258 = vmatprep.subr.mxu0 0.0
    %259 = vmatpush1.msra.mxu0 0.0
    %260 = vmatprep.subr.mxu0 0.0
    %261 = vmatpush1.msra.mxu0 0.0
    %262 = vmatprep.subr.mxu0 0.0
    %263 = vmatpush1.msra.mxu0 0.0
    %264 = vmatprep.subr.mxu0 0.0
    %265 = vmatpush1.msra.mxu0 0.0
    %266 = vmatprep.subr.mxu0 0.0
    %267 = vmatpush1.msra.mxu0 0.0
    %268 = vmatprep.subr.mxu0 0.0
    %269 = vmatpush1.msra.mxu0 0.0
    %270 = vmatprep.subr.mxu0 0.0
    %271 = vmatpush1.msra.mxu0 0.0
    %272 = vmatprep.subr.mxu0 0.0
    %273 = vmatpush1.msra.mxu0 0.0
    %274 = vmatprep.subr.mxu0 0.0
    %275 = vmatpush1.msra.mxu0 0.0
    %276 = vmatprep.subr.mxu0 0.0
    %277 = vmatpush1.msra.mxu0 0.0
    %278 = vmatprep.subr.mxu0 0.0
    %279 = vmatpush1.msra.mxu0 0.0
    %280 = vmatprep.subr.mxu0 0.0
    %281 = vmatpush1.msra.mxu0 0.0
    %282 = vmatprep.subr.mxu0 0.0
    %283 = vmatpush1.msra.mxu0 %v249
    %284 = vmatprep.subr.mxu0 0.0
    %285 = vmatpush1.msra.mxu0 %v248
    %286 = vmatprep.subr.mxu0 0.0
    %287 = vmatpush1.msra.mxu0 %v247
    %288 = vmatprep.subr.mxu0 0.0
    %289 = vmatpush1.msra.mxu0 %v246
    %290 = vmatprep.subr.mxu0 0.0
    %291 = vmatpush2.msra.mxu0 0.0
    %292 = vmatprep.subr.mxu0 0.0
    %293 = vmatpush2.msra.mxu0 0.0
    %294 = vmatprep.subr.mxu0 0.0
    %295 = vmatpush2.msra.mxu0 0.0
    %296 = vmatprep.subr.mxu0 0.0
    %297 = vmatpush2.msra.mxu0 0.0
    %298 = vmatprep.subr.mxu0 0.0
    %299 = vmatpush2.msra.mxu0 0.0
    %300 = vmatprep.subr.mxu0 0.0
    %301 = vmatpush2.msra.mxu0 0.0
    %302 = vmatprep.subr.mxu0 0.0
    %303 = vmatpush2.msra.mxu0 0.0
    %304 = vmatprep.subr.mxu0 0.0
    %305 = vmatpush2.msra.mxu0 0.0
    %306 = vmatprep.subr.mxu0 0.0
    %307 = vmatpush2.msra.mxu0 0.0
    %308 = vmatprep.subr.mxu0 0.0
    %309 = vmatpush2.msra.mxu0 0.0
    %310 = vmatprep.subr.mxu0 0.0
    %311 = vmatpush2.msra.mxu0 0.0
    %312 = vmatprep.subr.mxu0 0.0
    %313 = vmatpush2.msra.mxu0 0.0
    %314 = vmatprep.subr.mxu0 0.0
    %315 = vmatpush2.msra.mxu0 0.0
    %316 = vmatprep.subr.mxu0 0.0
    %317 = vmatpush2.msra.mxu0 0.0
    %318 = vmatprep.subr.mxu0 0.0
    %319 = vmatpush2.msra.mxu0 0.0
    %320 = vmatprep.subr.mxu0 0.0
    %321 = vmatpush2.msra.mxu0 0.0
    %322 = vmatprep.mubr.f32.mxu0 0.0
    %323 = vmatmul.mubr.f32.gmra.mxu0 %v256
    %v324 = vpop.f32.mrf.mxu0
    %v325 = vadd.f32 %v253, %v324
    %v326 = vpop.f32.mrf.mxu0
    %327 = vdwg.mxu0
    %vm328 = vcmp.lt.s32.totalorder %v27, 2
    %v329 = vsel %vm328, %v325, -inf
    %vm330 = vcmask 1040384
    %v331 = vsel %vm330, %v329, -inf
    %332 = vmax.xlane.f32.xlu0 %v331
    %v333 = vpop.xlane.xlu0 %332
    %v334 = vsub.f32 %v329, %v333
    %v335 = vmul.f32 %v334, 1.442695
    %v336 = vpow.pop %v335
    %v337 = vsel %vm330, %v336, 0.0
    %338 = vadd.xlane.f32.xlu0 %v337
    %v339 = vpop.xlane.xlu0 %338
    %v340 = vlog2.pop %v339
    %v341 = vmul.f32 %v340, 0.6931472
    %v342 = vadd.f32 %v341, %v333
    %v343 = vsub.f32 %v325, %v342
    %v344 = vsel %vm328, %v343, 0.0
    %vm345 = vcmp.lt.s32.totalorder %v27, 7
    %v346 = vsel %vm345, 1.0, 0.0
    %347 = vrot.lane.b32.xlu0 %v245, 64
    %v348 = vpop.permute.xlu0 %347
    %351 = vrot.lane.b32.xlu0 %v239, 32
    %v352 = vpop.permute.xlu0 %351
    %355 = vrot.lane.b32.xlu0 %v346, 96
    %v356 = vpop.permute.xlu0 %355
    %v358 = vsel %vm255, %v344, %v348
    %vm359 = vcmask 523264
    %v360 = vsel %vm359, %v358, %v352
    %vm361 = vcmask 785408
    %v362 = vsel %vm361, %v360, %v356
    %363 = vst [vmem:[%s2] sm:$0x1] %v362
    // Predicated region
    $region14: #{attention_decoder_lstm.1} parent=1 // pred_check
      _
    $region15: #{attention_decoder_lstm.1} parent=1 // pred_check_branch
      %365 = sbr.rel (0) target = $region17
    $region16: #{attention_decoder_lstm.1} parent=1 // pred_region
      _
    $region17: #{attention_decoder_lstm.1} parent=1 // pred_fallthru
      _
    // Predicated region
    $region18: #{attention_decoder_lstm.1} parent=1 // pred_check
      _
    $region19: #{attention_decoder_lstm.1} parent=1 // pred_check_branch
      %367 = sbr.rel (0) target = $region21
    $region20: #{attention_decoder_lstm.1} parent=1 // pred_region
      _
    $region21: #{attention_decoder_lstm.1} parent=1 // pred_fallthru
      _
    %368 = vsyncpa [#allocation3], 1

</llo_original>
